<compile_context>
chip_gen: v5e
topology: v5e:2x2
jax: 0.10.0
libtpu: 0.0.40
codegen_flags: <defaults>
</compile_context>

<pallas_src>
import jax
import jax.numpy as jnp
from jax.experimental import pallas as pl
from jax.experimental.pallas import tpu as pltpu


def _round_up(n, m):
    return ((n + m - 1) // m) * m


def siren_kernel(x_ref, w_ref, b_ref, o_ref):
    # x_ref: (TILE, k*D_in)   w_ref: (k*D_in, k*D_hid)   b_ref: (1, k*D_hid)
    y = jnp.dot(x_ref[...], w_ref[...], preferred_element_type=jnp.float32)
    o_ref[...] = jnp.sin(y + b_ref[...]).astype(o_ref.dtype)


def _siren_layer(x, weight, bias, w_freq, *, tile_rows=4096):
    """SIREN layer forward: sin((x @ weight.T + bias) * w_freq).

    x:      [B, D_in] float32
    weight: [D_hid, D_in] (torch nn.Linear layout)
    bias:   [D_hid]
    w_freq: scalar frequency
    """
    B, D_in = x.shape
    D_hid = weight.shape[0]
    x = x.astype(jnp.float32)

    # --- fold frequency into the weights/bias (tiny, one-shot) -------------
    w_freq = jnp.asarray(w_freq, jnp.float32)
    weight_t = (weight.astype(jnp.float32) * w_freq).T          # [D_in, D_hid]
    bias_f = bias.astype(jnp.float32) * w_freq                   # [D_hid]

    # --- lane-dense folding: block-diagonal weight, reshaped x --------------
    # Prefer making x fully lane-dense (k*D_in == 128); fall back to making
    # only the output lane-dense, else no fold.
    if D_in < 128 and 128 % D_in == 0:
        k = 128 // D_in
    elif D_hid < 128 and 128 % D_hid == 0:
        k = 128 // D_hid
    else:
        k = 1
    D_in_k, D_hid_k = k * D_in, k * D_hid

    if k > 1:
        eye = jnp.eye(k, dtype=jnp.float32)
        # block (a, a) of the [k*D_in, k*D_hid] matrix is weight_t
        w_blk = jnp.einsum("ab,ij->aibj", eye, weight_t).reshape(D_in_k, D_hid_k)
        b_blk = jnp.tile(bias_f, (k,)).reshape(1, D_hid_k)
    else:
        w_blk = weight_t
        b_blk = bias_f.reshape(1, D_hid_k)

    # --- tile sizing: clamp to a VMEM budget, then balance across the batch -
    bytes_per_row = (D_in_k + D_hid_k) * 4            # f32 in + out per folded row
    w_bytes = D_in_k * D_hid_k * 4 + D_hid_k * 4
    vmem_budget = 36 << 20                             # safe headroom on v7x (64 MiB)
    max_tile = max(8, (((vmem_budget - w_bytes) // (2 * bytes_per_row)) // 8) * 8)
    tile_rows = min(int(tile_rows), max_tile)

    b_fold_raw = pl.cdiv(B, k)
    n_tiles = max(1, pl.cdiv(b_fold_raw, tile_rows))
    # v7x has 2 TensorCores: give the "parallel" axis >= 2 steps when the
    # batch is big enough that per-step overhead stays negligible.
    if n_tiles == 1 and b_fold_raw >= 2048:
        n_tiles = 2
    tile = _round_up(pl.cdiv(b_fold_raw, n_tiles), 8)  # multiple of 8 sublanes
    b_fold = n_tiles * tile
    b_pad = b_fold * k

    # --- pad only the small tail (<= ~8*k*n_tiles rows after balancing) -----
    if b_pad != B:
        tail = jnp.zeros((b_pad - B, D_in), jnp.float32)
        x = jnp.concatenate([x, tail], axis=0)
    x_fold = x.reshape(b_fold, D_in_k)                 # free (row-major)

    vmem_limit = int(max(32 << 20, min(40 << 20,
                                       2 * tile * bytes_per_row + w_bytes + (4 << 20))))

    out_fold = pl.pallas_call(
        siren_kernel,
        out_shape=jax.ShapeDtypeStruct((b_fold, D_hid_k), jnp.float32),
        grid_spec=pltpu.PrefetchScalarGridSpec(
            num_scalar_prefetch=0,
            grid=(n_tiles,),
            in_specs=[
                pl.BlockSpec((tile, D_in_k), lambda i: (i, 0)),      # x tile
                pl.BlockSpec((D_in_k, D_hid_k), lambda i: (0, 0)),   # weight (resident)
                pl.BlockSpec((1, D_hid_k), lambda i: (0, 0)),        # bias (resident)
            ],
            out_specs=pl.BlockSpec((tile, D_hid_k), lambda i: (i, 0)),
        ),
        compiler_params=pltpu.CompilerParams(
            dimension_semantics=("parallel",),
            vmem_limit_bytes=vmem_limit),
    )(x_fold, w_blk, b_blk)

    # un-fold back to [B, D_hid]
    return out_fold.reshape(b_pad, D_hid)[:B]


# jit the wrapper so the w-fold, tail concat, reshapes and final slice fuse
# with (or at least dispatch alongside) the pallas_call instead of as separate
# tiny executables.
siren_layer = jax.jit(_siren_layer, static_argnames=("tile_rows",))


if __name__ == "__main__":
    # Small shapes consistent with the module: batch=8, input_dim=16, hidden=32
    B, D_in, D_hid = 8, 16, 32

    key = jax.random.PRNGKey(0)
    k_x, k_w, k_b, k_x2, k_x3 = jax.random.split(key, 5)

    # Deterministic nn.Linear-style init: U(-1/sqrt(in), 1/sqrt(in))
    bound = 1.0 / (D_in ** 0.5)
    weight = jax.random.uniform(k_w, (D_hid, D_in), jnp.float32, -bound, bound)
    bias = jax.random.uniform(k_b, (D_hid,), jnp.float32, -bound, bound)
    w_freq = jnp.float32(30.0)  # SIREN frequency scale `w`

    x = jax.random.uniform(k_x, (B, D_in), jnp.float32, -1.0, 1.0)
    out = jax.block_until_ready(siren_layer(x, weight, bias, w_freq))

    # Reference in plain JAX (mirrors torch: sin((x @ W.T + b) * w))
    ref = jnp.sin((x @ weight.T + bias) * w_freq)
    assert out.shape == (B, D_hid)
    assert jnp.allclose(out, ref, atol=1e-4, rtol=1e-4), float(
        jnp.max(jnp.abs(out - ref)))

    # Second check: ragged batch -> exercises the small-tail padding path.
    B2 = 300
    x2 = jax.random.uniform(k_x2, (B2, D_in), jnp.float32, -1.0, 1.0)
    out2 = jax.block_until_ready(siren_layer(x2, weight, bias, w_freq))
    ref2 = jnp.sin((x2 @ weight.T + bias) * w_freq)
    assert out2.shape == (B2, D_hid)
    assert jnp.allclose(out2, ref2, atol=1e-4, rtol=1e-4), float(
        jnp.max(jnp.abs(out2 - ref2)))

    # Third check: small tile_rows -> multi-step grid with balanced tiles and
    # weights resident across grid steps.
    B3 = 5000
    x3 = jax.random.uniform(k_x3, (B3, D_in), jnp.float32, -1.0, 1.0)
    out3 = jax.block_until_ready(siren_layer(x3, weight, bias, w_freq,
                                             tile_rows=256))
    ref3 = jnp.sin((x3 @ weight.T + bias) * w_freq)
    assert out3.shape == (B3, D_hid)
    assert jnp.allclose(out3, ref3, atol=1e-4, rtol=1e-4), float(
        jnp.max(jnp.abs(out3 - ref3)))

    print("KERNEL_OK")
</pallas_src>

<mosaic_0001>
module attributes {stable_mosaic.version = 11 : i64} {
  func.func @siren_kernel(%arg0: i32, %arg1: memref<8x128xf32, #tpu.memory_space<vmem>>, %arg2: memref<128x256xf32, #tpu.memory_space<vmem>>, %arg3: memref<1x256xf32, #tpu.memory_space<vmem>>, %arg4: memref<8x256xf32, #tpu.memory_space<vmem>>) attributes {dimension_semantics = [#tpu.dimension_semantics<parallel>], iteration_bounds = array<i64: 1>, scalar_prefetch = 0 : i64, scratch_operands = 0 : i64, tpu.core_type = #tpu.core_type<tc>, window_params = [{transform_indices = @transform_0, window_bounds = array<i64: 8, 128>}, {pipeline_mode = #tpu.pipeline_mode<synchronous>, transform_indices = @transform_1, window_bounds = array<i64: 128, 256>}, {pipeline_mode = #tpu.pipeline_mode<synchronous>, transform_indices = @transform_2, window_bounds = array<i64: 1, 256>}, {transform_indices = @transform_3, window_bounds = array<i64: 8, 256>}]} {
    %c0 = arith.constant 0 : index
    %c0_0 = arith.constant 0 : index
    %0 = vector.load %arg1[%c0, %c0_0] : memref<8x128xf32, #tpu.memory_space<vmem>>, vector<8x128xf32>
    %c0_1 = arith.constant 0 : index
    %c0_2 = arith.constant 0 : index
    %1 = vector.load %arg2[%c0_1, %c0_2] : memref<128x256xf32, #tpu.memory_space<vmem>>, vector<128x256xf32>
    %cst = arith.constant dense<0.000000e+00> : vector<8x256xf32>
    %2 = tpu.matmul %0, %1, %cst {dimension_numbers = #tpu.dot_dimension_numbers<[1], [0], [0], [1], [0, 0, 1, 1], [], []>} : vector<8x128xf32>, vector<128x256xf32>, vector<8x256xf32> -> vector<8x256xf32>
    %c0_3 = arith.constant 0 : index
    %c0_4 = arith.constant 0 : index
    %3 = vector.load %arg3[%c0_3, %c0_4] : memref<1x256xf32, #tpu.memory_space<vmem>>, vector<1x256xf32>
    %4 = vector.broadcast %3 : vector<1x256xf32> to vector<8x256xf32>
    %5 = arith.addf %2, %4 : vector<8x256xf32>
    %6 = math.sin %5 : vector<8x256xf32>
    %c0_5 = arith.constant 0 : index
    %c0_6 = arith.constant 0 : index
    %7 = vector.load %arg4[%c0_5, %c0_6] : memref<8x256xf32, #tpu.memory_space<vmem>>, vector<8x256xf32>
    tpu.vector_store %arg4[%c0_5, %c0_6], %6 {strides = array<i32>} : memref<8x256xf32, #tpu.memory_space<vmem>>, vector<8x256xf32>,
    return
  }
  func.func @transform_0(%arg0: i32) -> (i32, i32) {
    %c0_i32 = arith.constant 0 : i32
    %c0_i32_0 = arith.constant 0 : i32
    return %arg0, %c0_i32 : i32, i32
  }
  func.func @transform_1(%arg0: i32) -> (i32, i32) {
    %c0_i32 = arith.constant 0 : i32
    %c0_i32_0 = arith.constant 0 : i32
    %c0_i32_1 = arith.constant 0 : i32
    return %c0_i32, %c0_i32_0 : i32, i32
  }
  func.func @transform_2(%arg0: i32) -> (i32, i32) {
    %c0_i32 = arith.constant 0 : i32
    %c0_i32_0 = arith.constant 0 : i32
    %c0_i32_1 = arith.constant 0 : i32
    return %c0_i32, %c0_i32_0 : i32, i32
  }
  func.func @transform_3(%arg0: i32) -> (i32, i32) {
    %c0_i32 = arith.constant 0 : i32
    %c0_i32_0 = arith.constant 0 : i32
    return %arg0, %c0_i32 : i32, i32
  }
}

</mosaic_0001>

<llo_original>
// kernel: tile.8
$region0: #{tile.8}
  #allocation0 [shape = 's32[1]{0}', space=sflag, size = 0x4, scoped, tag = 'scoped memory for tile.8']
  %s0 = inlined_call_operand.vmem [shape: f32[32], index: 0, kind: input, shape index: {}]
  %s1 = inlined_call_operand.vmem [shape: f32[8,32], index: 1, kind: output, shape index: {}]
  // Predicated region
  $region2: #{tile.8} parent=0 // pred_check
    _
  $region3: #{tile.8} parent=0 // pred_check_branch
    %3 = sbr.rel (0) target = $region5
  $region4: #{tile.8} parent=0 // pred_region
    _
  $region5: #{tile.8} parent=0 // pred_fallthru
    _
  %v4 = vld [vmem:[%s0] ss:$0 sm:$0xff]
  %5 = vst [vmem:[%s1] sm:$0xff] %v4

// kernel: tile.9
$region0: #{tile.9}
  %s0 = inlined_call_operand.vmem [shape: f32[8,32], index: 0, kind: input, shape index: {}]
  %s1 = inlined_call_operand.vmem [shape: f32[1,256], index: 1, kind: output, shape index: {}]
  $region1: #{tile.9} parent=0
    #allocation0 [shape = 'u8[8192]{0}', space=vmem, size = 0x2000, scoped, tag = 'scoped mem for output reshape']
    %s2 = smov 3
    %v3 = vld [vmem:[%s0] ss:$4 sm:%s2]
    %vm4 = vcmask 261120
    %5 = vst.msk [vmem:[#allocation0] ss:$8 sm:$0x3] %vm4, %v3
    %s6 = scalar_lea.vmem %s0, 3
    %s7 = smov 3
    %v8 = vld [vmem:[%s6] ss:$4 sm:%s7]
    %9 = vrot.lane.b32.xlu0 %v8, 96
    %v10 = vpop.permute.xlu0 %9
    %vm11 = vcmask 1048320
    %12 = vst.msk [vmem:[#allocation0] ss:$8 sm:$0x3] %vm11, %v10
    %s13 = scalar_lea.vmem %s0, 2
    %s14 = smov 3
    %v15 = vld [vmem:[%s13] ss:$4 sm:%s14]
    %16 = vrot.lane.b32.xlu0 %v15, 64
    %v17 = vpop.permute.xlu0 %16
    %vm18 = vcmask 785920
    %19 = vst.msk [vmem:[#allocation0] ss:$8 sm:$0x3] %vm18, %v17
    %s20 = scalar_lea.vmem %s0, 1
    %s21 = smov 3
    %v22 = vld [vmem:[%s20] ss:$4 sm:%s21]
    %23 = vrot.lane.b32.xlu0 %v22, 32
    %v24 = vpop.permute.xlu0 %23
    %vm25 = vcmask 523520
    %26 = vst.msk [vmem:[#allocation0] ss:$8 sm:$0x3] %vm25, %v24
    %s28 = ssub.s32 2, 1
    %v29 = vld [vmem:[#allocation0] sm:%s28]
    %s31 = ssub.s32 2, 1
    %32 = vst [vmem:[%s1] sm:%s31] %v29
    %s33 = scalar_lea.vmem [#allocation0], 8
    %v34 = vld [vmem:[%s33] sm:%s28]
    %s36 = ssub.s32 2, 1
    %s37 = scalar_lea.vmem %s1, 1
    %38 = vst [vmem:[%s37] sm:%s36] %v34

// kernel: _siren_layer.1
$region0: #{_siren_layer.1}
  #allocation0 [shape = 'u32[]', space=smem, size = 0x4, offset = 0x4, fixed_abs, tag = 'smem constant byte address 0x4 - core index']
  #allocation1 [shape = 'u32[72,128]{1,0:T(1,128)}', space=vmem, size = 0x9000, scoped, tag = 'internal scratch']
  %s0 = inlined_call_operand.vmem [shape: f32[8,128], index: 0, kind: input, shape index: {}]
  %s1 = inlined_call_operand.vmem [shape: f32[128,256], index: 1, kind: input, shape index: {}]
  %s2 = inlined_call_operand.vmem [shape: f32[1,256], index: 2, kind: input, shape index: {}]
  %s3 = inlined_call_operand.vmem [shape: f32[8,256], index: 3, kind: output, shape index: {}]
  %s4 = sld [smem:[#allocation0]]
  $region22: #{_siren_layer.1} parent=0
    _
  %s6 = ssub.s32 1, %s4
  %s7 = scalar_select 0, %s6, %s4
  // Predicated region
  $region2: #{_siren_layer.1} parent=0 // pred_check
    _
  $region3: #{_siren_layer.1} parent=0 // pred_check_branch
    %9 = sbr.rel (0) target = $region5
  $region4: #{_siren_layer.1} parent=0 // pred_region
    _
  $region5: #{_siren_layer.1} parent=0 // pred_fallthru
    _
  // Predicated region
  $region6: #{_siren_layer.1} parent=0 // pred_check
    _
  $region7: #{_siren_layer.1} parent=0 // pred_check_branch
    %11 = sbr.rel (0) target = $region9
  $region8: #{_siren_layer.1} parent=0 // pred_region
    _
  $region9: #{_siren_layer.1} parent=0 // pred_fallthru
    _
  // Predicated region
  $region10: #{_siren_layer.1} parent=0 // pred_check
    _
  $region11: #{_siren_layer.1} parent=0 // pred_check_branch
    %13 = sbr.rel (0) target = $region13
  $region12: #{_siren_layer.1} parent=0 // pred_region
    _
  $region13: #{_siren_layer.1} parent=0 // pred_fallthru
    _
  %v14 = vld [vmem:[%s0] sm:$0xff]
  %v15 = vld [vmem:[%s1] sm:$0xff]
  %v16 = vld [vmem:[%s1 + $0x8] sm:$0xff]
  %v17 = vld [vmem:[%s1 + $0x10] sm:$0xff]
  %v18 = vld [vmem:[%s1 + $0x18] sm:$0xff]
  %v19 = vld [vmem:[%s1 + $0x20] sm:$0xff]
  %v20 = vld [vmem:[%s1 + $0x28] sm:$0xff]
  %v21 = vld [vmem:[%s1 + $0x30] sm:$0xff]
  %v22 = vld [vmem:[%s1 + $0x38] sm:$0xff]
  %v23 = vld [vmem:[%s1 + $0x40] sm:$0xff]
  %v24 = vld [vmem:[%s1 + $0x48] sm:$0xff]
  %v25 = vld [vmem:[%s1 + $0x50] sm:$0xff]
  %v26 = vld [vmem:[%s1 + $0x58] sm:$0xff]
  %v27 = vld [vmem:[%s1 + $0x60] sm:$0xff]
  %v28 = vld [vmem:[%s1 + $0x68] sm:$0xff]
  %v29 = vld [vmem:[%s1 + $0x70] sm:$0xff]
  %v30 = vld [vmem:[%s1 + $0x78] sm:$0xff]
  %v31 = vld [vmem:[%s1 + $0x80] sm:$0xff]
  %v32 = vld [vmem:[%s1 + $0x88] sm:$0xff]
  %v33 = vld [vmem:[%s1 + $0x90] sm:$0xff]
  %v34 = vld [vmem:[%s1 + $0x98] sm:$0xff]
  %v35 = vld [vmem:[%s1 + $0xa0] sm:$0xff]
  %v36 = vld [vmem:[%s1 + $0xa8] sm:$0xff]
  %v37 = vld [vmem:[%s1 + $0xb0] sm:$0xff]
  %v38 = vld [vmem:[%s1 + $0xb8] sm:$0xff]
  %v39 = vld [vmem:[%s1 + $0xc0] sm:$0xff]
  %v40 = vld [vmem:[%s1 + $0xc8] sm:$0xff]
  %v41 = vld [vmem:[%s1 + $0xd0] sm:$0xff]
  %v42 = vld [vmem:[%s1 + $0xd8] sm:$0xff]
  %v43 = vld [vmem:[%s1 + $0xe0] sm:$0xff]
  %v44 = vld [vmem:[%s1 + $0xe8] sm:$0xff]
  %v45 = vld [vmem:[%s1 + $0xf0] sm:$0xff]
  %v46 = vld [vmem:[%s1 + $0xf8] sm:$0xff]
  %v47 = vld [vmem:[%s2] sm:$0x3]
  %v49 = vperm.slane %v47, 0
  %v50 = vperm.slane %v47, 1
  %53 = vmatpush.msra.mxu0 %v45
  %54 = vmatpush.msra.mxu0 %v43
  %55 = vmatpush.msra.mxu0 %v41
  %56 = vmatpush.msra.mxu0 %v39
  %57 = vmatpush.msra.mxu0 %v37
  %58 = vmatpush.msra.mxu0 %v35
  %59 = vmatpush.msra.mxu0 %v33
  %60 = vmatpush.msra.mxu0 %v31
  %61 = vmatpush.msra.mxu0 %v29
  %62 = vmatpush.msra.mxu0 %v27
  %63 = vmatpush.msra.mxu0 %v25
  %64 = vmatpush.msra.mxu0 %v23
  %65 = vmatpush.msra.mxu0 %v21
  %66 = vmatpush.msra.mxu0 %v19
  %67 = vmatpush.msra.mxu0 %v17
  %68 = vmatpush.msra.mxu0 %v15
  %69 = vmatmul.f32.gmra.mxu0 %v14
  %v70 = vpop.f32.mrf.mxu0
  %v71 = vadd.f32 %v49, %v70
  %72 = vdwg.mxu0
  %73 = vmatpush.msra.mxu0 %v46
  %74 = vmatpush.msra.mxu0 %v44
  %75 = vmatpush.msra.mxu0 %v42
  %76 = vmatpush.msra.mxu0 %v40
  %77 = vmatpush.msra.mxu0 %v38
  %78 = vmatpush.msra.mxu0 %v36
  %79 = vmatpush.msra.mxu0 %v34
  %80 = vmatpush.msra.mxu0 %v32
  %81 = vmatpush.msra.mxu0 %v30
  %82 = vmatpush.msra.mxu0 %v28
  %83 = vmatpush.msra.mxu0 %v26
  %84 = vmatpush.msra.mxu0 %v24
  %85 = vmatpush.msra.mxu0 %v22
  %86 = vmatpush.msra.mxu0 %v20
  %87 = vmatpush.msra.mxu0 %v18
  %88 = vmatpush.msra.mxu0 %v16
  %89 = vmatmul.f32.gmra.mxu0 %v14
  %v90 = vpop.f32.mrf.mxu0
  %v91 = vadd.f32 %v50, %v90
  %92 = vdwg.mxu0
  %v93 = vand.u32 2147483647, %v71
  %vm94 = vcmp.le.f32.partialorder %v93, 0.7853982
  %vm95 = vcmp.lt.s32.totalorder %v71, 0
  %v96 = vand.u32 %v71, 2139095040
  %v97 = vshrl.u32 %v96, 23
  %v98 = vsub.s32 %v97, 127
  %v99 = vand.u32 2147483647, %v71
  %v100 = vand.u32 %v99, 8388607
  %v101 = vor.u32 %v100, 8388608
  %v102 = vsub.s32 0, %v101
  %v103 = vadd.s32 %v98, 1
  %vm104 = vcmp.gt.s32.totalorder %v103, 0
  %v105 = vsel %vm104, %v103, 0
  %v106 = vshrl.u32 %v105, 5
  %v107 = vand.u32 %v105, 31
  %v108 = vsub.s32 32, %v107
  %v109 = vshrl.u32 683565275, %v108
  %v110 = vshll.u32 683565275, %v107
  %v111 = vshrl.u32 2475754826, %v108
  %v112 = vor.u32 %v110, %v111
  %v113 = vshll.u32 2475754826, %v107
  %v114 = vshrl.u32 2131351028, %v108
  %v115 = vor.u32 %v113, %v114
  %v116 = vshll.u32 2131351028, %v107
  %v117 = vshrl.u32 2102212464, %v108
  %v118 = vor.u32 %v116, %v117
  %v119 = vshll.u32 2102212464, %v107
  %v120 = vshrl.u32 920167782, %v108
  %v121 = vor.u32 %v119, %v120
  %v122 = vshll.u32 920167782, %v107
  %v123 = vshrl.u32 1326507024, %v108
  %v124 = vor.u32 %v122, %v123
  %vm125 = vcmp.lt.s32.totalorder %v106, 1
  %vm126 = vcmp.lt.s32.totalorder %v106, 2
  %vm127 = vcmp.lt.s32.totalorder %v106, 3
  %vm128 = vcmp.lt.s32.totalorder %v106, 4
  %v129 = vsel %vm125, %v109, %v112
  %v130 = vsel %vm128, %v118, 2102212464
  %v131 = vsel %vm127, %v115, %v130
  %v132 = vsel %vm126, %v129, %v131
  %v133 = vsel %vm125, %v112, %v115
  %v134 = vsel %vm128, %v121, 920167782
  %v135 = vsel %vm127, %v118, %v134
  %v136 = vsel %vm126, %v133, %v135
  %v137 = vsel %vm125, %v115, %v118
  %v138 = vsel %vm128, %v124, 1326507024
  %v139 = vsel %vm127, %v121, %v138
  %v140 = vsel %vm126, %v137, %v139
  %v141 = vshll.u32 %v101, 8
  %v142 = vand.u32 %v141, 65535
  %v143 = vshrl.u32 %v141, 16
  %v144 = vand.u32 %v140, 65535
  %v145 = vshrl.u32 %v140, 16
  %v146 = vmul.u32 %v142, %v144
  %v147 = vmul.u32 %v142, %v145
  %v148 = vmul.u32 %v143, %v144
  %v149 = vmul.u32 %v143, %v145
  %v150 = vshll.u32 %v147, 16
  %v151 = vshrl.u32 %v147, 16
  %v152 = vshll.u32 %v148, 16
  %v153 = vshrl.u32 %v148, 16
  %vm154 = vc.u32 %v146, %v150
  %v155 = vsel %vm154, 1, 0
  %v156 = vadd.s32 %v146, %v150
  %v157 = vadd.s32 %v149, %v155
  %vm158 = vc.u32 %v156, %v152
  %v159 = vsel %vm158, 1, 0
  %v160 = vadd.s32 %v156, %v152
  %v161 = vadd.s32 %v157, %v159
  %v162 = vadd.s32 %v161, %v151
  %v163 = vadd.s32 %v162, %v153
  %v164 = vand.u32 %v141, 65535
  %v165 = vshrl.u32 %v141, 16
  %v166 = vand.u32 %v136, 65535
  %v167 = vshrl.u32 %v136, 16
  %v168 = vmul.u32 %v164, %v166
  %v169 = vmul.u32 %v164, %v167
  %v170 = vmul.u32 %v165, %v166
  %v171 = vmul.u32 %v165, %v167
  %v172 = vshll.u32 %v169, 16
  %v173 = vshrl.u32 %v169, 16
  %v174 = vshll.u32 %v170, 16
  %v175 = vshrl.u32 %v170, 16
  %vm176 = vc.u32 %v168, %v172
  %v177 = vsel %vm176, 1, 0
  %v178 = vadd.s32 %v168, %v172
  %v179 = vadd.s32 %v171, %v177
  %vm180 = vc.u32 %v178, %v174
  %v181 = vsel %vm180, 1, 0
  %v182 = vadd.s32 %v178, %v174
  %v183 = vadd.s32 %v179, %v181
  %v184 = vadd.s32 %v183, %v173
  %v185 = vadd.s32 %v184, %v175
  %v186 = vmul.u32 %v141, %v132
  %v187 = vadd.s32 %v163, %v182
  %vm188 = vc.u32 %v163, %v182
  %v189 = vadd.s32 %v185, 1
  %v190 = vsel %vm188, %v189, %v185
  %v191 = vadd.s32 %v186, %v190
  %v192 = vadd.s32 %v191, 536870912
  %v193 = vshrl.u32 %v192, 30
  %v194 = vshll.u32 %v193, 30
  %v195 = vsub.s32 %v191, %v194
  %vm196 = vcmp.lt.s32.totalorder %v195, 0
  %v197 = vsub.s32 0, %v195
  %v198 = vsel %vm196, %v197, %v195
  %v199 = vclz %v198
  %v200 = vsub.s32 %v199, 2
  %vm201 = vcmp.gt.s32.totalorder 0, %v200
  %v202 = vsel %vm201, 0, %v200
  %v203 = vsub.s32 32, %v202
  %v204 = vshll.u32 %v195, %v202
  %v205 = vshrl.u32 %v187, %v203
  %v206 = vor.u32 %v204, %v205
  %v207 = vsub.s32 4294967266, %v202
  %v208 = vadd.s32 %v207, 127
  %v209 = vshll.u32 %v208, 23
  %v210 = vor.u32 4788187, %v209
  %v211 = vand.u32 2147483647, %v210
  %v213 = vcvt.s32.f32 %v206
  %v214 = vmul.f32 %v213, %v211
  %v215 = vxor.u32 %v214, 2147483648
  %v216 = vsel %vm95, %v215, %v214
  %v217 = vsub.s32 4, %v193
  %v218 = vsel %vm95, %v217, %v193
  %v219 = vsel %vm94, %v71, %v216
  %v220 = vsel %vm94, 0, %v218
  %v221 = vmul.f32 %v219, %v219
  %v222 = vmul.f32 %v221, -0.001358992
  %v223 = vadd.f32 %v222, 0.041655596
  %v224 = vmul.f32 %v221, %v223
  %v225 = vadd.f32 %v224, -0.4999988
  %v226 = vmul.f32 %v221, %v225
  %v227 = vadd.f32 1.0, %v226
  %v228 = vmul.f32 %v219, %v219
  %v229 = vmul.f32 %v228, -0.00019511016
  %v230 = vadd.f32 %v229, 0.008332121
  %v231 = vmul.f32 %v228, %v230
  %v232 = vadd.f32 %v231, -0.16666654
  %v233 = vmul.f32 %v228, %v232
  %v234 = vadd.f32 %v233, 1.0
  %v235 = vmul.f32 %v234, %v219
  %vm236 = vweird.f32 %v71
  %v237 = vadd.s32 %v220, 3
  %v238 = vand.u32 %v237, 3
  %vm239 = vcmp.lt.s32.totalorder %v238, 2
  %vm240 = vcmp.eq.s32.totalorder %v238, 0
  %v241 = vxor.u32 %v235, 2147483648
  %v242 = vsel %vm240, %v227, %v241
  %vm243 = vcmp.eq.s32.totalorder %v238, 2
  %v244 = vxor.u32 %v227, 2147483648
  %v245 = vsel %vm243, %v244, %v235
  %v246 = vsel %vm239, %v242, %v245
  %v247 = vsel %vm236, nan, %v246
  %v248 = vand.u32 2147483647, %v91
  %vm249 = vcmp.le.f32.partialorder %v248, 0.7853982
  %vm250 = vcmp.lt.s32.totalorder %v91, 0
  %v251 = vand.u32 %v91, 2139095040
  %v252 = vshrl.u32 %v251, 23
  %v253 = vsub.s32 %v252, 127
  %v254 = vand.u32 2147483647, %v91
  %v255 = vand.u32 %v254, 8388607
  %v256 = vor.u32 %v255, 8388608
  %v257 = vsub.s32 0, %v256
  %v258 = vadd.s32 %v253, 1
  %vm259 = vcmp.gt.s32.totalorder %v258, 0
  %v260 = vsel %vm259, %v258, 0
  %v261 = vshrl.u32 %v260, 5
  %v262 = vand.u32 %v260, 31
  %v263 = vsub.s32 32, %v262
  %v264 = vshrl.u32 683565275, %v263
  %v265 = vshll.u32 683565275, %v262
  %v266 = vshrl.u32 2475754826, %v263
  %v267 = vor.u32 %v265, %v266
  %v268 = vshll.u32 2475754826, %v262
  %v269 = vshrl.u32 2131351028, %v263
  %v270 = vor.u32 %v268, %v269
  %v271 = vshll.u32 2131351028, %v262
  %v272 = vshrl.u32 2102212464, %v263
  %v273 = vor.u32 %v271, %v272
  %v274 = vshll.u32 2102212464, %v262
  %v275 = vshrl.u32 920167782, %v263
  %v276 = vor.u32 %v274, %v275
  %v277 = vshll.u32 920167782, %v262
  %v278 = vshrl.u32 1326507024, %v263
  %v279 = vor.u32 %v277, %v278
  %vm280 = vcmp.lt.s32.totalorder %v261, 1
  %vm281 = vcmp.lt.s32.totalorder %v261, 2
  %vm282 = vcmp.lt.s32.totalorder %v261, 3
  %vm283 = vcmp.lt.s32.totalorder %v261, 4
  %v284 = vsel %vm280, %v264, %v267
  %v285 = vsel %vm283, %v273, 2102212464
  %v286 = vsel %vm282, %v270, %v285
  %v287 = vsel %vm281, %v284, %v286
  %v288 = vsel %vm280, %v267, %v270
  %v289 = vsel %vm283, %v276, 920167782
  %v290 = vsel %vm282, %v273, %v289
  %v291 = vsel %vm281, %v288, %v290
  %v292 = vsel %vm280, %v270, %v273
  %v293 = vsel %vm283, %v279, 1326507024
  %v294 = vsel %vm282, %v276, %v293
  %v295 = vsel %vm281, %v292, %v294
  %v296 = vshll.u32 %v256, 8
  %v297 = vand.u32 %v296, 65535
  %v298 = vshrl.u32 %v296, 16
  %v299 = vand.u32 %v295, 65535
  %v300 = vshrl.u32 %v295, 16
  %v301 = vmul.u32 %v297, %v299
  %v302 = vmul.u32 %v297, %v300
  %v303 = vmul.u32 %v298, %v299
  %v304 = vmul.u32 %v298, %v300
  %v305 = vshll.u32 %v302, 16
  %v306 = vshrl.u32 %v302, 16
  %v307 = vshll.u32 %v303, 16
  %v308 = vshrl.u32 %v303, 16
  %vm309 = vc.u32 %v301, %v305
  %v310 = vsel %vm309, 1, 0
  %v311 = vadd.s32 %v301, %v305
  %v312 = vadd.s32 %v304, %v310
  %vm313 = vc.u32 %v311, %v307
  %v314 = vsel %vm313, 1, 0
  %v315 = vadd.s32 %v311, %v307
  %v316 = vadd.s32 %v312, %v314
  %v317 = vadd.s32 %v316, %v306
  %v318 = vadd.s32 %v317, %v308
  %v319 = vand.u32 %v296, 65535
  %v320 = vshrl.u32 %v296, 16
  %v321 = vand.u32 %v291, 65535
  %v322 = vshrl.u32 %v291, 16
  %v323 = vmul.u32 %v319, %v321
  %v324 = vmul.u32 %v319, %v322
  %v325 = vmul.u32 %v320, %v321
  %v326 = vmul.u32 %v320, %v322
  %v327 = vshll.u32 %v324, 16
  %v328 = vshrl.u32 %v324, 16
  %v329 = vshll.u32 %v325, 16
  %v330 = vshrl.u32 %v325, 16
  %vm331 = vc.u32 %v323, %v327
  %v332 = vsel %vm331, 1, 0
  %v333 = vadd.s32 %v323, %v327
  %v334 = vadd.s32 %v326, %v332
  %vm335 = vc.u32 %v333, %v329
  %v336 = vsel %vm335, 1, 0
  %v337 = vadd.s32 %v333, %v329
  %v338 = vadd.s32 %v334, %v336
  %v339 = vadd.s32 %v338, %v328
  %v340 = vadd.s32 %v339, %v330
  %v341 = vmul.u32 %v296, %v287
  %v342 = vadd.s32 %v318, %v337
  %vm343 = vc.u32 %v318, %v337
  %v344 = vadd.s32 %v340, 1
  %v345 = vsel %vm343, %v344, %v340
  %v346 = vadd.s32 %v341, %v345
  %v347 = vadd.s32 %v346, 536870912
  %v348 = vshrl.u32 %v347, 30
  %v349 = vshll.u32 %v348, 30
  %v350 = vsub.s32 %v346, %v349
  %vm351 = vcmp.lt.s32.totalorder %v350, 0
  %v352 = vsub.s32 0, %v350
  %v353 = vsel %vm351, %v352, %v350
  %v354 = vclz %v353
  %v355 = vsub.s32 %v354, 2
  %vm356 = vcmp.gt.s32.totalorder 0, %v355
  %v357 = vsel %vm356, 0, %v355
  %v358 = vsub.s32 32, %v357
  %v359 = vshll.u32 %v350, %v357
  %v360 = vshrl.u32 %v342, %v358
  %v361 = vor.u32 %v359, %v360
  %v362 = vsub.s32 4294967266, %v357
  %v363 = vadd.s32 %v362, 127
  %v364 = vshll.u32 %v363, 23
  %v365 = vor.u32 4788187, %v364
  %v366 = vand.u32 2147483647, %v365
  %v368 = vcvt.s32.f32 %v361
  %v369 = vmul.f32 %v368, %v366
  %v370 = vxor.u32 %v369, 2147483648
  %v371 = vsel %vm250, %v370, %v369
  %v372 = vsub.s32 4, %v348
  %v373 = vsel %vm250, %v372, %v348
  %v374 = vsel %vm249, %v91, %v371
  %v375 = vsel %vm249, 0, %v373
  %v376 = vmul.f32 %v374, %v374
  %v377 = vmul.f32 %v376, -0.001358992
  %v378 = vadd.f32 %v377, 0.041655596
  %v379 = vmul.f32 %v376, %v378
  %v380 = vadd.f32 %v379, -0.4999988
  %v381 = vmul.f32 %v376, %v380
  %v382 = vadd.f32 1.0, %v381
  %v383 = vmul.f32 %v374, %v374
  %v384 = vmul.f32 %v383, -0.00019511016
  %v385 = vadd.f32 %v384, 0.008332121
  %v386 = vmul.f32 %v383, %v385
  %v387 = vadd.f32 %v386, -0.16666654
  %v388 = vmul.f32 %v383, %v387
  %v389 = vadd.f32 %v388, 1.0
  %v390 = vmul.f32 %v389, %v374
  %vm391 = vweird.f32 %v91
  %v392 = vadd.s32 %v375, 3
  %v393 = vand.u32 %v392, 3
  %vm394 = vcmp.lt.s32.totalorder %v393, 2
  %vm395 = vcmp.eq.s32.totalorder %v393, 0
  %v396 = vxor.u32 %v390, 2147483648
  %v397 = vsel %vm395, %v382, %v396
  %vm398 = vcmp.eq.s32.totalorder %v393, 2
  %v399 = vxor.u32 %v382, 2147483648
  %v400 = vsel %vm398, %v399, %v390
  %v401 = vsel %vm394, %v397, %v400
  %v402 = vsel %vm391, nan, %v401
  %403 = vst [vmem:[%s3] sm:$0xff] %v247
  %404 = vst [vmem:[%s3 + $0x8] sm:$0xff] %v402
  // Predicated region
  $region14: #{_siren_layer.1} parent=0 // pred_check
    _
  $region15: #{_siren_layer.1} parent=0 // pred_check_branch
    %406 = sbr.rel (0) target = $region17
  $region16: #{_siren_layer.1} parent=0 // pred_region
    _
  $region17: #{_siren_layer.1} parent=0 // pred_fallthru
    _
  // Predicated region
  $region18: #{_siren_layer.1} parent=0 // pred_check
    _
  $region19: #{_siren_layer.1} parent=0 // pred_check_branch
    %408 = sbr.rel (0) target = $region21
  $region20: #{_siren_layer.1} parent=0 // pred_region
    _
  $region21: #{_siren_layer.1} parent=0 // pred_fallthru
    _

</llo_original>
